<compile_context>
chip_gen: v7x
topology: tpu7x:2x2x1
jax: 0.10.0
libtpu: 0.0.40
codegen_flags: <defaults>
</compile_context>

<pallas_src>
import math
from functools import partial

import jax
import jax.numpy as jnp
from jax.experimental import pallas as pl
from jax.experimental.pallas import tpu as pltpu


def _round_up(v, m):
    return ((v + m - 1) // m) * m


def _vmem_capacity_bytes():
    """Per-core VMEM capacity; conservative (v7x) fallback if query fails."""
    try:
        return int(pltpu.get_tpu_info().vmem_capacity_bytes)
    except Exception:
        return 64 << 20


def _is_multicore_chip():
    """True for chips with >1 TensorCore per chip (v4 / v5p / v7x)."""
    try:
        kind = jax.devices()[0].device_kind.lower().replace(" ", "")
    except Exception:
        return False
    return any(tag in kind for tag in ("v4", "v5p", "v7", "7x"))


# ---------------------------------------------------------------------------
# Kernel
# ---------------------------------------------------------------------------
def swiglu_kernel(x_ref, w13_ref, w2_ref, o_ref, acc_ref, *, tf):
    """One (token-row tile i, d_ff stream tile k) grid step.

    x_ref   : (tm, d_model)     -- constant along k
    w13_ref : (d_model, 2*tf)   -- [W1.T tile k | W3.T tile k] (contiguous block)
    w2_ref  : (tf, d_model)     -- W2.T tile k
    o_ref   : (tm, d_model)     -- written at last k step
    acc_ref : (tm, d_model) f32 -- VMEM accumulator
    """
    k = pl.program_id(1)

    @pl.when(k == 0)
    def _():
        acc_ref[...] = jnp.zeros_like(acc_ref)

    x = x_ref[...]
    # Single wide MXU pass for both the W1 and W3 projections of this tile.
    h = jnp.dot(x, w13_ref[...], preferred_element_type=jnp.float32)  # (tm, 2*tf)
    w1x = h[:, :tf]          # tf is a multiple of 128 -> tile-aligned split
    w3x = h[:, tf:]

    # SiLU gate in f32 (sigmoid -> EUP, muls -> VPU; free under MXU/DMA).
    z = (w1x * jax.nn.sigmoid(w1x)) * w3x

    # Partial down-projection for this d_ff tile, accumulated in f32.
    acc_ref[...] += jnp.dot(z.astype(w2_ref.dtype), w2_ref[...],
                            preferred_element_type=jnp.float32)

    @pl.when(k == pl.num_programs(1) - 1)
    def _():
        o_ref[...] = acc_ref[...].astype(o_ref.dtype)


# ---------------------------------------------------------------------------
# One-time weight preparation (outside the per-call hot path)
# ---------------------------------------------------------------------------
def prepare_swiglu_params(W1, W2, W3, *, tf=None, param_dtype=None):
    """W1, W3: (d_ff, d_model); W2: (d_model, d_ff).

    Returns (w13t, w2t, d_ff_pad, tf) where
      w13t: (n_k, d_model, 2*tf) -- per-k-tile contiguous [W1.T | W3.T] blocks
      w2t : (d_ff_pad, d_model)  -- W2.T (zero-padded rows)
    tf is always a multiple of 128; d_ff is zero-padded to a multiple of tf
    (padding columns/rows contribute exactly 0 to the result).
    """
    d_ff, d_model = W1.shape

    if tf is None:
        # Smaller stream tile on 64 MiB-VMEM chips buys headroom for a bigger tm.
        tf = 512 if _vmem_capacity_bytes() >= (96 << 20) else 256
    tf = max(128, _round_up(tf, 128))
    tf = min(tf, _round_up(d_ff, 128))

    d_ff_pad = _round_up(d_ff, tf)
    n_k = d_ff_pad // tf

    pad = d_ff_pad - d_ff
    if pad:
        W1 = jnp.pad(W1, ((0, pad), (0, 0)))
        W3 = jnp.pad(W3, ((0, pad), (0, 0)))
        W2 = jnp.pad(W2, ((0, 0), (0, pad)))

    if param_dtype is not None:
        W1 = W1.astype(param_dtype)
        W2 = W2.astype(param_dtype)
        W3 = W3.astype(param_dtype)

    w1t = jnp.transpose(W1.T.reshape(d_model, n_k, tf), (1, 0, 2))  # (n_k, d_model, tf)
    w3t = jnp.transpose(W3.T.reshape(d_model, n_k, tf), (1, 0, 2))
    w13t = jnp.concatenate([w1t, w3t], axis=2)                      # (n_k, d_model, 2*tf)
    w2t = W2.T                                                      # (d_ff_pad, d_model)
    return w13t, w2t, d_ff_pad, tf


# ---------------------------------------------------------------------------
# Tile selection
# ---------------------------------------------------------------------------
def _auto_tm(d_model, tf, xbytes, wbytes, vmem_cap, row_mult):
    """Largest token-row tile whose double-buffered working set fits VMEM."""
    budget = int(0.75 * vmem_cap)
    # Weight buffers (double-buffered along the streamed k axis).
    fixed = 2 * d_model * (2 * tf) * wbytes + 2 * tf * d_model * wbytes
    # Per-token-row bytes: x + out (double-buffered), f32 acc, f32 intermediates.
    per_row = (2 * d_model * xbytes + 2 * d_model * xbytes + 4 * d_model
               + 4 * (2 * tf)        # h
               + 4 * (3 * tf))       # w1x / w3x / z (conservative)
    tm = (budget - fixed) // max(per_row, 1)
    tm = int(max(row_mult, min(tm, 1024)))
    if tm >= 256:
        tm = (tm // 128) * 128
    else:
        tm = (tm // row_mult) * row_mult
    return max(row_mult, tm)


# ---------------------------------------------------------------------------
# Forward wrapper
# ---------------------------------------------------------------------------
def swiglu_pallas(x, w13t, w2t, d_ff_pad, tf, *, tm=None):
    """x: (..., d_model). Weights come from prepare_swiglu_params."""
    d_model = x.shape[-1]
    orig_shape = x.shape
    out_dtype = x.dtype

    compute_dtype = w13t.dtype
    x2d = x.reshape(-1, d_model).astype(compute_dtype)
    M = x2d.shape[0]

    xbytes = jnp.dtype(compute_dtype).itemsize
    wbytes = jnp.dtype(w13t.dtype).itemsize
    obytes = jnp.dtype(out_dtype).itemsize
    row_mult = max(8, 32 // max(1, xbytes))       # 8 for f32, 16 for bf16
    vmem_cap = _vmem_capacity_bytes()

    if tm is None:
        tm = _auto_tm(d_model, tf, xbytes, wbytes, vmem_cap, row_mult)

    tm_eff = max(row_mult, min(_round_up(tm, row_mult), _round_up(M, row_mult)))
    tm_eff = (tm_eff // row_mult) * row_mult

    # On 2-TensorCore chips make sure the "parallel" row axis has >= 2 tiles.
    if _is_multicore_chip():
        while tm_eff > row_mult and pl.cdiv(M, tm_eff) < 2:
            tm_eff = max(row_mult, ((tm_eff // 2) // row_mult) * row_mult)

    M_pad = _round_up(M, tm_eff)
    if M_pad != M:
        x2d = jnp.pad(x2d, ((0, M_pad - M), (0, 0)))

    n_row_tiles = M_pad // tm_eff
    n_k = d_ff_pad // tf
    grid = (n_row_tiles, n_k)

    # VMEM working set (double-buffered blocks + f32 accumulator + intermediates).
    vmem_need = (
        2 * tm_eff * d_model * xbytes          # x blocks
        + 2 * d_model * (2 * tf) * wbytes      # fused W1/W3 blocks
        + 2 * tf * d_model * wbytes            # W2 blocks
        + 2 * tm_eff * d_model * obytes        # output blocks
        + tm_eff * d_model * 4                 # f32 accumulator
        + tm_eff * (2 * tf) * 4                # h
        + tm_eff * (3 * tf) * 4                # gate intermediates
    )
    vmem_limit = int(min(max(vmem_need + (4 << 20), 32 << 20),
                         int(0.9 * vmem_cap)))

    flops = 6 * M_pad * d_model * d_ff_pad     # 4*M*D*F up-proj + 2*M*F*D down-proj
    bytes_accessed = (
        M_pad * d_model * (xbytes + obytes)                      # x in + out
        + (w13t.size * wbytes + w2t.size * wbytes) * n_row_tiles  # weight re-stream
    )

    out2d = pl.pallas_call(
        partial(swiglu_kernel, tf=tf),
        out_shape=jax.ShapeDtypeStruct((M_pad, d_model), out_dtype),
        grid_spec=pltpu.PrefetchScalarGridSpec(
            num_scalar_prefetch=0,
            grid=grid,
            in_specs=[
                pl.BlockSpec((tm_eff, d_model), lambda i, k: (i, 0)),
                # Leading (n_k) dim squeezed: one fully contiguous weight block per k.
                pl.BlockSpec((None, d_model, 2 * tf), lambda i, k: (k, 0, 0)),
                pl.BlockSpec((tf, d_model), lambda i, k: (k, 0)),
            ],
            out_specs=pl.BlockSpec((tm_eff, d_model), lambda i, k: (i, 0)),
            scratch_shapes=[pltpu.VMEM((tm_eff, d_model), jnp.float32)],
        ),
        compiler_params=pltpu.CompilerParams(
            dimension_semantics=("parallel", "arbitrary"),
            vmem_limit_bytes=vmem_limit,
        ),
        cost_estimate=pl.CostEstimate(
            flops=flops,
            transcendentals=M_pad * d_ff_pad,
            bytes_accessed=bytes_accessed,
        ),
    )(x2d, w13t, w2t)

    return out2d[:M].reshape(orig_shape)


# ---------------------------------------------------------------------------
# Init + reference
# ---------------------------------------------------------------------------
def init_swiglu_params(key, d_model, d_ff, dtype=jnp.float32):
    """Truncated-normal init matching the PyTorch module."""
    std = math.sqrt(2.0 / (d_model + d_ff))
    k1, k2, k3 = jax.random.split(key, 3)
    W1 = std * jax.random.truncated_normal(k1, -3.0, 3.0, (d_ff, d_model), dtype)
    W2 = std * jax.random.truncated_normal(k2, -3.0, 3.0, (d_model, d_ff), dtype)
    W3 = std * jax.random.truncated_normal(k3, -3.0, 3.0, (d_ff, d_model), dtype)
    return W1, W2, W3


def swiglu_ref(x, W1, W2, W3):
    """Pure-JAX reference matching the PyTorch forward."""
    w1x = jnp.einsum("...d,fd->...f", x, W1)
    w3x = jnp.einsum("...d,fd->...f", x, W3)
    z = (w1x * jax.nn.sigmoid(w1x)) * w3x
    return jnp.einsum("...f,df->...d", z, W2)


if __name__ == "__main__":
    key = jax.random.PRNGKey(0)
    d_model, d_ff = 32, 64
    batch, seq = 2, 8

    kx, kp = jax.random.split(key)
    x = jax.random.normal(kx, (batch, seq, d_model), dtype=jnp.float32)
    W1, W2, W3 = init_swiglu_params(kp, d_model, d_ff)

    # One-time weight preparation (outside the hot path).
    # For large f32 models pass param_dtype=jnp.bfloat16 here to run the MXU
    # in bf16 (f32 accumulation is kept inside the kernel).
    w13t, w2t, d_ff_pad, tf = prepare_swiglu_params(W1, W2, W3)

    out = swiglu_pallas(x, w13t, w2t, d_ff_pad, tf)
    out = jax.block_until_ready(out)

    ref = swiglu_ref(x, W1, W2, W3)
    assert out.shape == ref.shape == (batch, seq, d_model)
    assert jnp.allclose(out, ref, atol=1e-4, rtol=1e-4), "mismatch vs reference"

    print("KERNEL_OK")
</pallas_src>

<mosaic_0001>
module attributes {stable_mosaic.version = 11 : i64} {
  func.func @swiglu_kernel(%arg0: i32, %arg1: i32, %arg2: memref<16x32xf32, #tpu.memory_space<vmem>>, %arg3: memref<1x32x256xf32, #tpu.memory_space<vmem>>, %arg4: memref<128x32xf32, #tpu.memory_space<vmem>>, %arg5: memref<16x32xf32, #tpu.memory_space<vmem>>, %arg6: memref<16x32xf32, #tpu.memory_space<vmem>>) attributes {dimension_semantics = [#tpu.dimension_semantics<parallel>, #tpu.dimension_semantics<arbitrary>], iteration_bounds = array<i64: 1, 1>, scalar_prefetch = 0 : i64, scratch_operands = 1 : i64, tpu.core_type = #tpu.core_type<tc>, window_params = [{transform_indices = @transform_0, window_bounds = array<i64: 16, 32>}, {transform_indices = @transform_1, window_bounds = array<i64: 1, 32, 256>}, {transform_indices = @transform_2, window_bounds = array<i64: 128, 32>}, {transform_indices = @transform_3, window_bounds = array<i64: 16, 32>}]} {
    %c0_i32 = arith.constant 0 : i32
    %0 = arith.cmpi eq, %arg1, %c0_i32 : i32
    %1 = arith.extui %0 : i1 to i32
    %c0_i32_0 = arith.constant 0 : i32
    %2 = arith.cmpi ne, %1, %c0_i32_0 : i32
    scf.if %2 {
      %cst_15 = arith.constant 0.000000e+00 : f32
      %24 = vector.broadcast %cst_15 : f32 to vector<16x32xf32>
      %c0_16 = arith.constant 0 : index
      %c0_17 = arith.constant 0 : index
      %25 = vector.load %arg6[%c0_16, %c0_17] : memref<16x32xf32, #tpu.memory_space<vmem>>, vector<16x32xf32>
      tpu.vector_store %arg6[%c0_16, %c0_17], %24 {strides = array<i32>} : memref<16x32xf32, #tpu.memory_space<vmem>>, vector<16x32xf32>,
    } else {
    }
    %c0 = arith.constant 0 : index
    %c0_1 = arith.constant 0 : index
    %3 = vector.load %arg2[%c0, %c0_1] : memref<16x32xf32, #tpu.memory_space<vmem>>, vector<16x32xf32>
    %c0_2 = arith.constant 0 : index
    %c0_3 = arith.constant 0 : index
    %c0_4 = arith.constant 0 : index
    %4 = vector.load %arg3[%c0_2, %c0_3, %c0_4] : memref<1x32x256xf32, #tpu.memory_space<vmem>>, vector<1x32x256xf32>
    %5 = vector.shape_cast %4 : vector<1x32x256xf32> to vector<32x256xf32>
    %cst = arith.constant dense<0.000000e+00> : vector<16x256xf32>
    %6 = tpu.matmul %3, %5, %cst {dimension_numbers = #tpu.dot_dimension_numbers<[1], [0], [0], [1], [0, 0, 1, 1], [], []>} : vector<16x32xf32>, vector<32x256xf32>, vector<16x256xf32> -> vector<16x256xf32>
    %7 = vector.extract_strided_slice %6 {offsets = [0, 0], sizes = [16, 128], strides = [1, 1]} : vector<16x256xf32> to vector<16x128xf32>
    %8 = vector.extract_strided_slice %6 {offsets = [0, 128], sizes = [16, 128], strides = [1, 1]} : vector<16x256xf32> to vector<16x128xf32>
    %9 = arith.negf %7 : vector<16x128xf32>
    %10 = math.exp %9 : vector<16x128xf32>
    %cst_5 = arith.constant 1.000000e+00 : f32
    %11 = vector.broadcast %cst_5 : f32 to vector<16x128xf32>
    %12 = arith.addf %11, %10 : vector<16x128xf32>
    %13 = arith.divf %11, %12 : vector<16x128xf32>
    %14 = arith.mulf %7, %13 : vector<16x128xf32>
    %15 = arith.mulf %14, %8 : vector<16x128xf32>
    %c0_6 = arith.constant 0 : index
    %c0_7 = arith.constant 0 : index
    %16 = vector.load %arg6[%c0_6, %c0_7] : memref<16x32xf32, #tpu.memory_space<vmem>>, vector<16x32xf32>
    %c0_8 = arith.constant 0 : index
    %c0_9 = arith.constant 0 : index
    %17 = vector.load %arg4[%c0_8, %c0_9] : memref<128x32xf32, #tpu.memory_space<vmem>>, vector<128x32xf32>
    %cst_10 = arith.constant dense<0.000000e+00> : vector<16x32xf32>
    %18 = tpu.matmul %15, %17, %cst_10 {dimension_numbers = #tpu.dot_dimension_numbers<[1], [0], [0], [1], [0, 0, 1, 1], [], []>} : vector<16x128xf32>, vector<128x32xf32>, vector<16x32xf32> -> vector<16x32xf32>
    %19 = arith.addf %16, %18 : vector<16x32xf32>
    %c0_11 = arith.constant 0 : index
    %c0_12 = arith.constant 0 : index
    %20 = vector.load %arg6[%c0_11, %c0_12] : memref<16x32xf32, #tpu.memory_space<vmem>>, vector<16x32xf32>
    tpu.vector_store %arg6[%c0_11, %c0_12], %19 {strides = array<i32>} : memref<16x32xf32, #tpu.memory_space<vmem>>, vector<16x32xf32>,
    %c0_i32_13 = arith.constant 0 : i32
    %21 = arith.cmpi eq, %arg1, %c0_i32_13 : i32
    %22 = arith.extui %21 : i1 to i32
    %c0_i32_14 = arith.constant 0 : i32
    %23 = arith.cmpi ne, %22, %c0_i32_14 : i32
    scf.if %23 {
      %c0_15 = arith.constant 0 : index
      %c0_16 = arith.constant 0 : index
      %24 = vector.load %arg6[%c0_15, %c0_16] : memref<16x32xf32, #tpu.memory_space<vmem>>, vector<16x32xf32>
      %c0_17 = arith.constant 0 : index
      %c0_18 = arith.constant 0 : index
      %25 = vector.load %arg5[%c0_17, %c0_18] : memref<16x32xf32, #tpu.memory_space<vmem>>, vector<16x32xf32>
      tpu.vector_store %arg5[%c0_17, %c0_18], %24 {strides = array<i32>} : memref<16x32xf32, #tpu.memory_space<vmem>>, vector<16x32xf32>,
    } else {
    }
    return
  }
  func.func @transform_0(%arg0: i32, %arg1: i32) -> (i32, i32) {
    %c0_i32 = arith.constant 0 : i32
    %c0_i32_0 = arith.constant 0 : i32
    return %arg0, %c0_i32 : i32, i32
  }
  func.func @transform_1(%arg0: i32, %arg1: i32) -> (i32, i32, i32) {
    %c0_i32 = arith.constant 0 : i32
    %c0_i32_0 = arith.constant 0 : i32
    %c0_i32_1 = arith.constant 0 : i32
    return %arg1, %c0_i32, %c0_i32_0 : i32, i32, i32
  }
  func.func @transform_2(%arg0: i32, %arg1: i32) -> (i32, i32) {
    %c0_i32 = arith.constant 0 : i32
    %c0_i32_0 = arith.constant 0 : i32
    return %arg1, %c0_i32 : i32, i32
  }
  func.func @transform_3(%arg0: i32, %arg1: i32) -> (i32, i32) {
    %c0_i32 = arith.constant 0 : i32
    %c0_i32_0 = arith.constant 0 : i32
    return %arg0, %c0_i32 : i32, i32
  }
}

</mosaic_0001>

<llo_original>
// kernel: tpu_custom_call.1
$region0: #{tpu_custom_call.1}
  #allocation0 [shape = 'u32[]', space=smem, size = 0x4, offset = 0x4, fixed_abs, tag = 'smem constant byte address 0x4 - core index']
  #allocation1 [shape = 'u32[144,128]{1,0:T(1,128)}', space=vmem, size = 0x12000, scoped, tag = 'internal scratch']
  #allocation2 [shape = 'f32[16,32]{1,0:T(8,128)}', space=vmem, size = 0x2000, scoped, tag = 'scratch operand']
  %s0 = inlined_call_operand.vmem [shape: f32[16,32], index: 0, kind: input, shape index: {}]
  %s1 = inlined_call_operand.vmem [shape: f32[1,32,256], index: 1, kind: input, shape index: {}]
  %s2 = inlined_call_operand.vmem [shape: f32[128,32], index: 2, kind: input, shape index: {}]
  %s3 = inlined_call_operand.hbm [shape: f32[16,32], index: 3, kind: output, shape index: {}]
  %s4 = sld [smem:[#allocation0]]
  $region30: #{tpu_custom_call.1} parent=0
    _
  %s6 = ssub.s32 1, %s4
  %s7 = scalar_select 0, %s6, %s4
  $region1: #{tpu_custom_call.1} parent=0
    #allocation3 [shape = 'u8[8192]{0}', space=vmem, size = 0x2000, scoped, tag = 'output window, operand 0, single buffered']
    #allocation4 [shape = 's32[1]{0}', space=sflag, size = 0x4, scoped, tag = 'scoped memory for tpu_custom_call.1']
    %8 = vsyncpa [#allocation4], 0
    // Predicated region
    $region2: #{tpu_custom_call.1} parent=1 // pred_check
      _
    $region3: #{tpu_custom_call.1} parent=1 // pred_check_branch
      %10 = sbr.rel (0) target = $region5
    $region4: #{tpu_custom_call.1} parent=1 // pred_region
      _
    $region5: #{tpu_custom_call.1} parent=1 // pred_fallthru
      _
    // Predicated region
    $region6: #{tpu_custom_call.1} parent=1 // pred_check
      _
    $region7: #{tpu_custom_call.1} parent=1 // pred_check_branch
      %12 = sbr.rel (0) target = $region9
    $region8: #{tpu_custom_call.1} parent=1 // pred_region
      _
    $region9: #{tpu_custom_call.1} parent=1 // pred_fallthru
      _
    // Predicated region
    $region10: #{tpu_custom_call.1} parent=1 // pred_check
      _
    $region11: #{tpu_custom_call.1} parent=1 // pred_check_branch
      %14 = sbr.rel (0) target = $region13
    $region12: #{tpu_custom_call.1} parent=1 // pred_region
      _
    $region13: #{tpu_custom_call.1} parent=1 // pred_fallthru
      _
    %p15 = scmp.eq.s32.totalorder 0, 0
    // Predicated region
    $region14: #{tpu_custom_call.1} parent=1 // pred_check
      %p16 = pneg %p15
    $region15: #{tpu_custom_call.1} parent=1 // pred_check_branch
      %18 = sbr.rel (%p16) target = $region17
    $region16: #{tpu_custom_call.1} parent=1 // pred_region
      %vm19 = vcmask 261120
      %20 = vst.msk [vmem:[#allocation2] sm:$0xff] %vm19, 0.0
      %21 = vst.msk [vmem:[#allocation2 + $0x8] sm:$0xff] %vm19, 0.0
    $region17: #{tpu_custom_call.1} parent=1 // pred_fallthru
      _
    %v22 = vld [vmem:[%s0] sm:$0xff]
    %v23 = vld [vmem:[%s0 + $0x8] sm:$0xff]
    %v24 = vld [vmem:[%s1] sm:$0xff]
    %v25 = vld [vmem:[%s1 + $0x8] sm:$0xff]
    %v26 = vld [vmem:[%s1 + $0x10] sm:$0xff]
    %v27 = vld [vmem:[%s1 + $0x18] sm:$0xff]
    %v28 = vld [vmem:[%s1 + $0x20] sm:$0xff]
    %v29 = vld [vmem:[%s1 + $0x28] sm:$0xff]
    %v30 = vld [vmem:[%s1 + $0x30] sm:$0xff]
    %v31 = vld [vmem:[%s1 + $0x38] sm:$0xff]
    %vm32 = vcmask 261120
    %v34 = vsel %vm32, %v22, 0
    %v37 = vsel %vm32, %v23, 0
    %39 = vmatprep.subr.mxu0 %v25
    %40 = vmatpush1.msra.mxu0 %v24
    %41 = vmatprep.subr.mxu0 %v27
    %42 = vmatpush1.msra.mxu0 %v26
    %43 = vmatprep.subr.mxu0 %v29
    %44 = vmatpush1.msra.mxu0 %v28
    %45 = vmatprep.subr.mxu0 %v31
    %46 = vmatpush1.msra.mxu0 %v30
    %47 = vmatprep.subr.mxu0 0.0
    %48 = vmatpush1.msra.mxu0 0.0
    %49 = vmatprep.subr.mxu0 0.0
    %50 = vmatpush1.msra.mxu0 0.0
    %51 = vmatprep.subr.mxu0 0.0
    %52 = vmatpush1.msra.mxu0 0.0
    %53 = vmatprep.subr.mxu0 0.0
    %54 = vmatpush1.msra.mxu0 0.0
    %55 = vmatprep.subr.mxu0 0.0
    %56 = vmatpush1.msra.mxu0 0.0
    %57 = vmatprep.subr.mxu0 0.0
    %58 = vmatpush1.msra.mxu0 0.0
    %59 = vmatprep.subr.mxu0 0.0
    %60 = vmatpush1.msra.mxu0 0.0
    %61 = vmatprep.subr.mxu0 0.0
    %62 = vmatpush1.msra.mxu0 0.0
    %63 = vmatprep.subr.mxu0 0.0
    %64 = vmatpush1.msra.mxu0 0.0
    %65 = vmatprep.subr.mxu0 0.0
    %66 = vmatpush1.msra.mxu0 0.0
    %67 = vmatprep.subr.mxu0 0.0
    %68 = vmatpush1.msra.mxu0 0.0
    %69 = vmatprep.subr.mxu0 0.0
    %70 = vmatpush1.msra.mxu0 0.0
    %71 = vmatprep.subr.mxu0 0.0
    %72 = vmatpush1.msra.mxu0 0.0
    %73 = vmatprep.subr.mxu0 0.0
    %74 = vmatpush1.msra.mxu0 0.0
    %75 = vmatprep.subr.mxu0 0.0
    %76 = vmatpush1.msra.mxu0 0.0
    %77 = vmatprep.subr.mxu0 0.0
    %78 = vmatpush1.msra.mxu0 0.0
    %79 = vmatprep.subr.mxu0 0.0
    %80 = vmatpush1.msra.mxu0 0.0
    %81 = vmatprep.subr.mxu0 0.0
    %82 = vmatpush1.msra.mxu0 0.0
    %83 = vmatprep.subr.mxu0 0.0
    %84 = vmatpush1.msra.mxu0 0.0
    %85 = vmatprep.subr.mxu0 0.0
    %86 = vmatpush1.msra.mxu0 0.0
    %87 = vmatprep.subr.mxu0 0.0
    %88 = vmatpush1.msra.mxu0 0.0
    %89 = vmatprep.subr.mxu0 0.0
    %90 = vmatpush1.msra.mxu0 0.0
    %91 = vmatprep.subr.mxu0 0.0
    %92 = vmatpush1.msra.mxu0 0.0
    %93 = vmatprep.subr.mxu0 0.0
    %94 = vmatpush1.msra.mxu0 0.0
    %95 = vmatprep.subr.mxu0 0.0
    %96 = vmatpush1.msra.mxu0 0.0
    %97 = vmatprep.subr.mxu0 0.0
    %98 = vmatpush1.msra.mxu0 0.0
    %99 = vmatprep.subr.mxu0 0.0
    %100 = vmatpush1.msra.mxu0 0.0
    %101 = vmatprep.subr.mxu0 0.0
    %102 = vmatpush1.msra.mxu0 0.0
    %103 = vmatprep.mubr.f32.mxu0 0.0
    %104 = vmatmul.mubr.f32.gmra.mrb[0].mxu0 %v34
    %v105 = vpop.f32.mrb[0].mxu0
    %v106 = vadd.f32 0.0, %v105
    %v107 = vpop.f32.mrb[0].mxu0
    %v108 = vadd.f32 0.0, %v107
    %109 = vmatprep.mubr.f32.mxu0 0.0
    %110 = vmatmul.mubr.f32.gmra.mrb[0].mxu0 %v37
    %v111 = vpop.f32.mrb[0].mxu0
    %v112 = vadd.f32 0.0, %v111
    %v113 = vpop.f32.mrb[0].mxu0
    %v114 = vadd.f32 0.0, %v113
    %115 = vdwg.mxu0
    %v116 = vxor.u32 %v106, 2147483648
    %v117 = vxor.u32 %v112, 2147483648
    %v118 = vmul.f32 %v116, 1.442695
    %v119 = vpow.pop %v118
    %v120 = vmul.f32 %v117, 1.442695
    %v121 = vpow.pop %v120
    %v122 = vadd.f32 %v119, 1.0
    %v123 = vadd.f32 %v121, 1.0
    %v124 = vrcp.pop %v122
    %v125 = vmul.f32 1.0, %v124
    %v126 = vrcp.pop %v123
    %v127 = vmul.f32 1.0, %v126
    %v128 = vmul.f32 %v106, %v125
    %v129 = vmul.f32 %v112, %v127
    %v130 = vmul.f32 %v128, %v108
    %v131 = vmul.f32 %v129, %v114
    %v132 = vld [vmem:[#allocation2] sm:$0xff]
    %v133 = vld [vmem:[#allocation2 + $0x8] sm:$0xff]
    %v134 = vld [vmem:[%s2] sm:$0xff]
    %v135 = vld [vmem:[%s2 + $0x8] sm:$0xff]
    %v136 = vld [vmem:[%s2 + $0x10] sm:$0xff]
    %v137 = vld [vmem:[%s2 + $0x18] sm:$0xff]
    %v138 = vld [vmem:[%s2 + $0x20] sm:$0xff]
    %v139 = vld [vmem:[%s2 + $0x28] sm:$0xff]
    %v140 = vld [vmem:[%s2 + $0x30] sm:$0xff]
    %v141 = vld [vmem:[%s2 + $0x38] sm:$0xff]
    %v142 = vld [vmem:[%s2 + $0x40] sm:$0xff]
    %v143 = vld [vmem:[%s2 + $0x48] sm:$0xff]
    %v144 = vld [vmem:[%s2 + $0x50] sm:$0xff]
    %v145 = vld [vmem:[%s2 + $0x58] sm:$0xff]
    %v146 = vld [vmem:[%s2 + $0x60] sm:$0xff]
    %v147 = vld [vmem:[%s2 + $0x68] sm:$0xff]
    %v148 = vld [vmem:[%s2 + $0x70] sm:$0xff]
    %v149 = vld [vmem:[%s2 + $0x78] sm:$0xff]
    %150 = vmatprep.subr.mxu0 0.0
    %151 = vmatpush1.msra.mxu0 %v134
    %152 = vmatprep.subr.mxu0 0.0
    %153 = vmatpush1.msra.mxu0 %v135
    %154 = vmatprep.subr.mxu0 0.0
    %155 = vmatpush1.msra.mxu0 %v136
    %156 = vmatprep.subr.mxu0 0.0
    %157 = vmatpush1.msra.mxu0 %v137
    %158 = vmatprep.subr.mxu0 0.0
    %159 = vmatpush1.msra.mxu0 %v138
    %160 = vmatprep.subr.mxu0 0.0
    %161 = vmatpush1.msra.mxu0 %v139
    %162 = vmatprep.subr.mxu0 0.0
    %163 = vmatpush1.msra.mxu0 %v140
    %164 = vmatprep.subr.mxu0 0.0
    %165 = vmatpush1.msra.mxu0 %v141
    %166 = vmatprep.subr.mxu0 0.0
    %167 = vmatpush1.msra.mxu0 %v142
    %168 = vmatprep.subr.mxu0 0.0
    %169 = vmatpush1.msra.mxu0 %v143
    %170 = vmatprep.subr.mxu0 0.0
    %171 = vmatpush1.msra.mxu0 %v144
    %172 = vmatprep.subr.mxu0 0.0
    %173 = vmatpush1.msra.mxu0 %v145
    %174 = vmatprep.subr.mxu0 0.0
    %175 = vmatpush1.msra.mxu0 %v146
    %176 = vmatprep.subr.mxu0 0.0
    %177 = vmatpush1.msra.mxu0 %v147
    %178 = vmatprep.subr.mxu0 0.0
    %179 = vmatpush1.msra.mxu0 %v148
    %180 = vmatprep.subr.mxu0 0.0
    %181 = vmatpush1.msra.mxu0 %v149
    %182 = vmatprep.subr.mxu0 0.0
    %183 = vmatpush1.msra.mxu0 0.0
    %184 = vmatprep.subr.mxu0 0.0
    %185 = vmatpush1.msra.mxu0 0.0
    %186 = vmatprep.subr.mxu0 0.0
    %187 = vmatpush1.msra.mxu0 0.0
    %188 = vmatprep.subr.mxu0 0.0
    %189 = vmatpush1.msra.mxu0 0.0
    %190 = vmatprep.subr.mxu0 0.0
    %191 = vmatpush1.msra.mxu0 0.0
    %192 = vmatprep.subr.mxu0 0.0
    %193 = vmatpush1.msra.mxu0 0.0
    %194 = vmatprep.subr.mxu0 0.0
    %195 = vmatpush1.msra.mxu0 0.0
    %196 = vmatprep.subr.mxu0 0.0
    %197 = vmatpush1.msra.mxu0 0.0
    %198 = vmatprep.subr.mxu0 0.0
    %199 = vmatpush1.msra.mxu0 0.0
    %200 = vmatprep.subr.mxu0 0.0
    %201 = vmatpush1.msra.mxu0 0.0
    %202 = vmatprep.subr.mxu0 0.0
    %203 = vmatpush1.msra.mxu0 0.0
    %204 = vmatprep.subr.mxu0 0.0
    %205 = vmatpush1.msra.mxu0 0.0
    %206 = vmatprep.subr.mxu0 0.0
    %207 = vmatpush1.msra.mxu0 0.0
    %208 = vmatprep.subr.mxu0 0.0
    %209 = vmatpush1.msra.mxu0 0.0
    %210 = vmatprep.subr.mxu0 0.0
    %211 = vmatpush1.msra.mxu0 0.0
    %212 = vmatprep.subr.mxu0 0.0
    %213 = vmatpush1.msra.mxu0 0.0
    %214 = vmatprep.mubr.f32.mxu0 0.0
    %215 = vmatmul.mubr.f32.gmra.mrb[0].mxu0 %v130
    %v216 = vpop.f32.mrb[0].mxu0
    %v217 = vadd.f32 0.0, %v216
    %v218 = vpop.f32.mrb[0].mxu0
    %219 = vmatprep.mubr.f32.mxu0 0.0
    %220 = vmatmul.mubr.f32.gmra.mrb[0].mxu0 %v131
    %v221 = vpop.f32.mrb[0].mxu0
    %v222 = vadd.f32 0.0, %v221
    %v223 = vpop.f32.mrb[0].mxu0
    %224 = vdwg.mxu0
    %v225 = vadd.f32 %v132, %v217
    %v226 = vadd.f32 %v133, %v222
    %227 = vst.msk [vmem:[#allocation2] sm:$0xff] %vm32, %v225
    %228 = vst.msk [vmem:[#allocation2 + $0x8] sm:$0xff] %vm32, %v226
    // Predicated region
    $region18: #{tpu_custom_call.1} parent=1 // pred_check
      %p229 = pneg %p15
    $region19: #{tpu_custom_call.1} parent=1 // pred_check_branch
      %231 = sbr.rel (%p229) target = $region21
    $region20: #{tpu_custom_call.1} parent=1 // pred_region
      %v232 = vld [vmem:[#allocation2] sm:$0xff]
      %v233 = vld [vmem:[#allocation2 + $0x8] sm:$0xff]
      %234 = vst.msk [vmem:[#allocation3] sm:$0xff] %vm32, %v232
      %235 = vst.msk [vmem:[#allocation3 + $0x8] sm:$0xff] %vm32, %v233
    $region21: #{tpu_custom_call.1} parent=1 // pred_fallthru
      _
    // Predicated region
    $region22: #{tpu_custom_call.1} parent=1 // pred_check
      _
    $region23: #{tpu_custom_call.1} parent=1 // pred_check_branch
      %237 = sbr.rel (0) target = $region25
    $region24: #{tpu_custom_call.1} parent=1 // pred_region
      %s239 = ssub.s32 256, 256
      %240 = vsyncadd [#allocation4], %s239
      %s241 = sshll.u32 [#allocation3], 4
      %s242 = int_to_ptr.vmem [resolvable:$true] %s241
      %247 = dma.vmem_to_hbm [thread:$0]  %s242, 256, %s3, [#allocation4], 128, 128, 8
    $region25: #{tpu_custom_call.1} parent=1 // pred_fallthru
      _
    // Predicated region
    $region26: #{tpu_custom_call.1} parent=1 // pred_check
      _
    $region27: #{tpu_custom_call.1} parent=1 // pred_check_branch
      %249 = sbr.rel (0) target = $region29
    $region28: #{tpu_custom_call.1} parent=1 // pred_region
      %250 = dma.done [#allocation4], 256
    $region29: #{tpu_custom_call.1} parent=1 // pred_fallthru
      _
    %251 = vsyncpa [#allocation4], 1

</llo_original>
